<compile_context>
chip_gen: v7x
topology: tpu7x:2x2x1
jax: 0.10.0
libtpu: 0.0.40
codegen_flags: <defaults>
</compile_context>

<pallas_src>
import functools

import jax
import jax.numpy as jnp
from jax import lax
from jax.experimental import pallas as pl
from jax.experimental.pallas import tpu as pltpu

TIME_STEPS = 4


def _vmem_capacity_bytes(default=64 * 1024 * 1024):
    """Physical VMEM of the current TPU generation (conservative default if unknown)."""
    try:
        return int(getattr(pltpu.get_tpu_info(), "vmem_capacity_bytes", default))
    except Exception:
        return default


# --------------------------------------------------------------------------------------
# Fused TAB(+LIF) Pallas kernel
# --------------------------------------------------------------------------------------
def _tab_lif_kernel(x_ref, g_ref, b_ref, o_ref,
                    shift_ref, sum_ref, sumsq_ref, *maybe_mem,
                    eps, n_rows, tau, v_th, fire, group, seg):
    """One (channel-tile, time-step) grid point.

    Block layout: x/o blocks are (B, Ct, L) with L on lanes.
      group == 1 : L == H*W (one real channel per sublane row); per-channel stats are
                   (Ct, 1) and broadcast over lanes.
      group  > 1 : L == group*seg (seg = H*W < 128); each sublane row packs `group`
                   real channels, channel j occupying lanes [j*seg, (j+1)*seg).
                   Per-channel stats / affine are kept lane-expanded, shape (Ct, L).
    """
    mem_ref = maybe_mem[0] if fire else None
    t = pl.program_id(1)                                   # time = last (carried) grid axis

    x = x_ref[...].astype(jnp.float32)                     # (B, Ct, L) — L on lanes
    _, Ct, L = x.shape

    if group == 1:
        def ch_sum(v):                                     # (B, Ct, L) -> (Ct, 1)
            return jnp.sum(jnp.sum(v, axis=0), axis=-1, keepdims=True)
    else:
        lane = lax.broadcasted_iota(jnp.int32, (Ct, L), 1)
        masks = [((lane >= j * seg) & (lane < (j + 1) * seg)).astype(jnp.float32)
                 for j in range(group)]

        def ch_sum(v):                                     # (B, Ct, L) -> (Ct, L), expanded
            vb = jnp.sum(v, axis=0)                        # (Ct, L)
            out = jnp.zeros((Ct, L), jnp.float32)
            for m in masks:
                s = jnp.sum(vb * m, axis=-1, keepdims=True)    # (Ct, 1) per real channel
                out = out + m * s
            return out

    @pl.when(t == 0)
    def _():
        # shift = per-channel mean of the t=0 block; accumulating shifted sums avoids
        # the E[x^2]-E[x]^2 cancellation problem.
        shift_ref[...] = ch_sum(x) * (1.0 / n_rows)
        sum_ref[...] = jnp.zeros_like(sum_ref)
        sumsq_ref[...] = jnp.zeros_like(sumsq_ref)
        if fire:
            mem_ref[...] = jnp.zeros_like(mem_ref)

    xs = x - shift_ref[...]                                # raw x is dead after this point
    sum_ref[...] += ch_sum(xs)
    sumsq_ref[...] += ch_sum(xs * xs)

    count = (t + 1).astype(jnp.float32) * n_rows           # B*(t+1)*H*W per channel
    inv_count = 1.0 / count
    mean_s = sum_ref[...] * inv_count                      # shifted mean
    var = sumsq_ref[...] * inv_count - mean_s * mean_s     # biased var (BN training mode)
    var = jnp.maximum(var, 0.0)                            # guard tiny negatives (roundoff)
    inv_std = lax.rsqrt(var + eps)

    # folded affine on the shifted values:
    #   y = (x - mean)*inv_std*p^2*gamma + p^2*beta = xs*a + (p^2*beta - mean_s*a)
    a = g_ref[t] * inv_std
    b = b_ref[t] - mean_s * a
    y = xs * a + b                                         # (B, Ct, L)

    if fire:
        mem = tau * mem_ref[...] + y
        spike = (mem > v_th).astype(jnp.float32)           # strict '>' as in TriangleSG
        mem_ref[...] = mem * (1.0 - spike)
        o_ref[...] = spike.astype(o_ref.dtype)
    else:
        o_ref[...] = y.astype(o_ref.dtype)


def tab_lif_forward(x, p, gamma, beta, *, eps=1e-5, fire=False, tau=0.9, v_th=1.0,
                    out_dtype=None):
    """x: (B, T, C, H, W). Returns TAB output (fire=False) or LIF spikes (fire=True)."""
    B, T, C, H, W = x.shape
    HW = H * W
    out_dtype = x.dtype if out_dtype is None else jnp.dtype(out_dtype)

    # Lane-dense packing: for the small spatial stages (H*W < 128, e.g. 8x8), pack
    # `group` channels per sublane row so the lane axis is 128 wide (free reshape).
    if HW < 128 and 128 % HW == 0 and C % (128 // HW) == 0:
        group = 128 // HW
    else:
        group = 1
    Cg = C // group
    L = group * HW
    x4 = x.reshape(B, T, Cg, L)                            # contiguous -> free reshape

    # fold p**2 into the per-step BN affine (tiny (T, C) arrays)
    p2 = (p.reshape(T, 1).astype(jnp.float32)) ** 2
    g2 = p2 * gamma.reshape(T, C).astype(jnp.float32)
    b2 = p2 * beta.reshape(T, C).astype(jnp.float32)
    if group == 1:
        stat_last = 1
        g3 = g2.reshape(T, Cg, 1)
        b3 = b2.reshape(T, Cg, 1)
    else:
        stat_last = L                                      # lane-expanded affine
        g3 = jnp.broadcast_to(g2.reshape(T, Cg, group, 1),
                              (T, Cg, group, HW)).reshape(T, Cg, L)
        b3 = jnp.broadcast_to(b2.reshape(T, Cg, group, 1),
                              (T, Cg, group, HW)).reshape(T, Cg, L)

    in_bytes = jnp.dtype(x.dtype).itemsize
    out_bytes = jnp.dtype(out_dtype).itemsize

    # generation-aware VMEM budget (v7x: 64 MiB physical, v5e/v6e: 128 MiB)
    vmem_cap = _vmem_capacity_bytes()
    vmem_limit = max(min(int(0.75 * vmem_cap), 96 * 1024 * 1024), 32 * 1024 * 1024)
    tile_budget = int(0.8 * vmem_limit)                    # headroom for compiler scratch

    # sublane multiple for the channel tile (16 for 2-byte dtypes — sublane packing)
    min_mult = 16 if min(in_bytes, out_bytes) < 4 else 8

    def vmem_need(ct):
        blk = B * ct * L
        need = 2 * blk * in_bytes + 2 * blk * out_bytes    # x / out double buffers
        need += 2 * 2 * T * ct * stat_last * 4             # resident gamma/beta blocks
        need += 3 * ct * stat_last * 4                     # shift/sum/sumsq scratch
        if fire:
            need += blk * 4                                # f32 membrane scratch
        return need

    def can_halve(c):
        return c % 2 == 0 and (c // 2) % min_mult == 0

    ct = Cg
    if can_halve(ct):                                      # >= 2 channel tiles when
        ct //= 2                                           # possible (v7x: 2 TCs)
    while vmem_need(ct) > tile_budget and can_halve(ct):
        ct //= 2
    n_ct = Cg // ct

    kernel = functools.partial(_tab_lif_kernel, eps=eps, n_rows=float(B * HW),
                               tau=tau, v_th=v_th, fire=fire, group=group, seg=HW)

    scratch = [pltpu.VMEM((ct, stat_last), jnp.float32),   # shift (t=0 channel mean)
               pltpu.VMEM((ct, stat_last), jnp.float32),   # cumulative shifted sum
               pltpu.VMEM((ct, stat_last), jnp.float32)]   # cumulative shifted sum of sq.
    if fire:
        scratch.append(pltpu.VMEM((B, ct, L), jnp.float32))  # LIF membrane (fire only)

    cost = pl.CostEstimate(
        flops=10 * B * T * C * HW,
        transcendentals=T * C,
        bytes_accessed=B * T * C * HW * (in_bytes + out_bytes) + 2 * T * C * 4,
    )

    out = pl.pallas_call(
        kernel,
        out_shape=jax.ShapeDtypeStruct((B, T, Cg, L), out_dtype),
        grid_spec=pltpu.PrefetchScalarGridSpec(
            num_scalar_prefetch=0,
            grid=(n_ct, T),                                # carried (time) axis LAST
            in_specs=[
                pl.BlockSpec((B, None, ct, L), lambda c, t: (0, t, c, 0)),   # x slab
                pl.BlockSpec((T, ct, stat_last), lambda c, t: (0, c, 0)),    # p^2*gamma
                pl.BlockSpec((T, ct, stat_last), lambda c, t: (0, c, 0)),    # p^2*beta
            ],
            out_specs=pl.BlockSpec((B, None, ct, L), lambda c, t: (0, t, c, 0)),
            scratch_shapes=scratch,
        ),
        compiler_params=pltpu.CompilerParams(
            dimension_semantics=("parallel", "arbitrary"),
            vmem_limit_bytes=vmem_limit,
        ),
        cost_estimate=cost,
    )(x4, g3, b3)
    return out.reshape(B, T, C, H, W)


# --------------------------------------------------------------------------------------
# Pure-JAX references (for correctness checks)
# --------------------------------------------------------------------------------------
def tab_layer_reference(x, p, gamma, beta, eps=1e-5):
    B, T, C, H, W = x.shape
    p_flat = p.reshape(T)
    outs = []
    for t in range(T):
        xt = x[:, : t + 1]
        mean = jnp.mean(xt, axis=(0, 1, 3, 4))
        var = jnp.mean((xt - mean[None, None, :, None, None]) ** 2, axis=(0, 1, 3, 4))
        x_hat = (x[:, t] - mean[None, :, None, None]) / jnp.sqrt(var + eps)[None, :, None, None]
        y = gamma[t][None, :, None, None] * x_hat + beta[t][None, :, None, None]
        outs.append((p_flat[t] ** 2) * y)
    return jnp.stack(outs, axis=1)


def lif_reference(x, tau, v_th):
    T = x.shape[1]
    mem = jnp.zeros(x[:, 0].shape, x.dtype)
    spikes = []
    for t in range(T):
        mem = tau * mem + x[:, t]
        s = (mem > v_th).astype(x.dtype)
        mem = mem * (1.0 - s)
        spikes.append(s)
    return jnp.stack(spikes, axis=1)


# --------------------------------------------------------------------------------------
# VGG9 forward (convs / pool / fc via XLA; TAB+LIF via the fused Pallas kernel)
# --------------------------------------------------------------------------------------
def _kaiming_conv(key, c_out, c_in, k):
    std = (2.0 / (c_out * k * k)) ** 0.5                   # mode='fan_out', relu
    return std * jax.random.normal(key, (c_out, c_in, k, k), dtype=jnp.float32)


def _linear(key, n_out, n_in):
    k1, k2 = jax.random.split(key)
    bound = 1.0 / (n_in ** 0.5)
    w = jax.random.uniform(k1, (n_out, n_in), minval=-bound, maxval=bound, dtype=jnp.float32)
    b = jax.random.uniform(k2, (n_out,), minval=-bound, maxval=bound, dtype=jnp.float32)
    return w, b


def init_vgg9_params(key, time_steps=TIME_STEPS):
    cfg = [(3, 64), (64, 64), (64, 128), (128, 128), (128, 256), (256, 256), (256, 256)]
    keys = jax.random.split(key, len(cfg) + 2)
    convs = [_kaiming_conv(keys[i], co, ci, 3) for i, (ci, co) in enumerate(cfg)]
    tabs = [dict(gamma=jnp.ones((time_steps, co), jnp.float32),     # BN affine defaults
                 beta=jnp.zeros((time_steps, co), jnp.float32),
                 p=jnp.ones((time_steps,), jnp.float32))            # p = ones
            for (_, co) in cfg]
    fc1 = _linear(keys[-2], 1024, 256 * 4 * 4)
    fc2 = _linear(keys[-1], 10, 1024)
    return dict(convs=convs, tabs=tabs, fc1=fc1, fc2=fc2)


def _seq_conv(x, w):                                       # SeqToANNContainer(Conv2d 3x3, pad 1)
    B, T, C, H, W = x.shape
    y = lax.conv_general_dilated(
        x.reshape(B * T, C, H, W), w, window_strides=(1, 1),
        padding=((1, 1), (1, 1)), dimension_numbers=("NCHW", "OIHW", "NCHW"))
    return y.reshape(B, T, w.shape[0], H, W)


def _seq_avgpool2(x):                                      # SeqToANNContainer(AvgPool2d(2, 2))
    B, T, C, H, W = x.shape
    return x.reshape(B, T, C, H // 2, 2, W // 2, 2).mean(axis=(4, 6))


def vgg9_forward(params, img, *, tau=0.9, v_th=1.0, time_steps=TIME_STEPS,
                 compute_dtype=jnp.bfloat16):
    B = img.shape[0]
    x = jnp.broadcast_to(img[:, None], (B, time_steps) + img.shape[1:])   # input_expand
    x = x.astype(compute_dtype)                            # bf16 activations end-to-end
    pool_after = (1, 3, 6)
    for i, (w, tab) in enumerate(zip(params["convs"], params["tabs"])):
        x = _seq_conv(x, w.astype(compute_dtype))          # bf16 MXU conv, bf16 output
        # fused TAB_Layer + LIFNeuron(firing=True); spikes (0/1) are exact in bf16
        x = tab_lif_forward(x, tab["p"], tab["gamma"], tab["beta"],
                            fire=True, tau=tau, v_th=v_th, out_dtype=compute_dtype)
        if i in pool_after:
            x = _seq_avgpool2(x)                           # exact on 0/1 spikes
    x = x.reshape(B, time_steps, -1).astype(jnp.float32)   # torch.flatten(x, 2)
    w1, b1 = params["fc1"]
    w2, b2 = params["fc2"]
    x = x @ w1.T + b1                                      # fc1 (dropout = identity)
    x = x @ w2.T + b2                                      # fc2
    return x


# --------------------------------------------------------------------------------------
if __name__ == "__main__":
    key = jax.random.PRNGKey(0)
    k_tab, k_tab2, k_net, k_img = jax.random.split(key, 4)

    # --- standalone TAB_Layer check, HW >= 128 path (Pallas vs pure-JAX reference) ---
    B, T, C, H, W = 2, 4, 8, 16, 16
    kx, kp, kg, kb = jax.random.split(k_tab, 4)
    x = jax.random.normal(kx, (B, T, C, H, W), dtype=jnp.float32)
    p = 1.0 + 0.1 * jax.random.normal(kp, (T, 1, 1, 1, 1), dtype=jnp.float32)
    gamma = 1.0 + 0.1 * jax.random.normal(kg, (T, C), dtype=jnp.float32)
    beta = 0.1 * jax.random.normal(kb, (T, C), dtype=jnp.float32)

    y = jax.block_until_ready(tab_lif_forward(x, p, gamma, beta, fire=False))
    y_ref = tab_layer_reference(x, p, gamma, beta)
    assert y.shape == (B, T, C, H, W)
    assert jnp.allclose(y, y_ref, rtol=1e-4, atol=1e-4), float(jnp.max(jnp.abs(y - y_ref)))

    spk = jax.block_until_ready(
        tab_lif_forward(x, p, gamma, beta, fire=True, tau=0.9, v_th=1.0))
    spk_ref = lif_reference(y_ref, 0.9, 1.0)
    assert float(jnp.mean(jnp.abs(spk - spk_ref))) < 5e-3   # tolerate rare threshold flips

    # --- standalone check for the lane-dense grouped path (H*W = 64 < 128) ---
    B2, C2, H2 = 2, 16, 8
    kx2, kp2, kg2, kb2 = jax.random.split(k_tab2, 4)
    x2 = jax.random.normal(kx2, (B2, T, C2, H2, H2), dtype=jnp.float32)
    p2_ = 1.0 + 0.1 * jax.random.normal(kp2, (T,), dtype=jnp.float32)
    gamma2 = 1.0 + 0.1 * jax.random.normal(kg2, (T, C2), dtype=jnp.float32)
    beta2 = 0.1 * jax.random.normal(kb2, (T, C2), dtype=jnp.float32)

    y2 = jax.block_until_ready(tab_lif_forward(x2, p2_, gamma2, beta2, fire=False))
    y2_ref = tab_layer_reference(x2, p2_, gamma2, beta2)
    assert jnp.allclose(y2, y2_ref, rtol=1e-4, atol=1e-4), float(jnp.max(jnp.abs(y2 - y2_ref)))

    spk2 = jax.block_until_ready(
        tab_lif_forward(x2, p2_, gamma2, beta2, fire=True, tau=0.9, v_th=1.0))
    spk2_ref = lif_reference(y2_ref, 0.9, 1.0)
    assert float(jnp.mean(jnp.abs(spk2 - spk2_ref))) < 5e-3

    # --- full VGG9 forward at a small CIFAR-shaped input (bf16 activation path) ---
    params = init_vgg9_params(k_net)
    img = jax.random.normal(k_img, (2, 3, 32, 32), dtype=jnp.float32)
    logits = jax.block_until_ready(jax.jit(vgg9_forward)(params, img))
    assert logits.shape == (2, TIME_STEPS, 10)
    assert bool(jnp.all(jnp.isfinite(logits)))

    print("KERNEL_OK")
</pallas_src>

<mosaic_0001>
module attributes {stable_mosaic.version = 11 : i64} {
  func.func @_tab_lif_kernel(%arg0: i32, %arg1: i32, %arg2: memref<2x1x8x256xf32, #tpu.memory_space<vmem>>, %arg3: memref<4x8x1xf32, #tpu.memory_space<vmem>>, %arg4: memref<4x8x1xf32, #tpu.memory_space<vmem>>, %arg5: memref<2x1x8x256xf32, #tpu.memory_space<vmem>>, %arg6: memref<8x1xf32, #tpu.memory_space<vmem>>, %arg7: memref<8x1xf32, #tpu.memory_space<vmem>>, %arg8: memref<8x1xf32, #tpu.memory_space<vmem>>) attributes {dimension_semantics = [#tpu.dimension_semantics<parallel>, #tpu.dimension_semantics<arbitrary>], iteration_bounds = array<i64: 1, 4>, scalar_prefetch = 0 : i64, scratch_operands = 3 : i64, tpu.core_type = #tpu.core_type<tc>, window_params = [{transform_indices = @transform_0, window_bounds = array<i64: 2, 1, 8, 256>}, {transform_indices = @transform_1, window_bounds = array<i64: 4, 8, 1>}, {transform_indices = @transform_2, window_bounds = array<i64: 4, 8, 1>}, {transform_indices = @transform_3, window_bounds = array<i64: 2, 1, 8, 256>}]} {
    %c0 = arith.constant 0 : index
    %c0_0 = arith.constant 0 : index
    %c0_1 = arith.constant 0 : index
    %c0_2 = arith.constant 0 : index
    %0 = vector.load %arg2[%c0, %c0_0, %c0_1, %c0_2] : memref<2x1x8x256xf32, #tpu.memory_space<vmem>>, vector<2x1x8x256xf32>
    %1 = vector.shape_cast %0 : vector<2x1x8x256xf32> to vector<2x8x256xf32>
    %c0_i32 = arith.constant 0 : i32
    %2 = arith.cmpi eq, %arg1, %c0_i32 : i32
    %3 = arith.extui %2 : i1 to i32
    %c0_i32_3 = arith.constant 0 : i32
    %4 = arith.cmpi ne, %3, %c0_i32_3 : i32
    scf.if %4 {
      %cst_33 = arith.constant dense<0.000000e+00> : vector<8x256xf32>
      %57 = vector.multi_reduction <add>, %1, %cst_33 [0] : vector<2x8x256xf32> to vector<8x256xf32>
      %cst_34 = arith.constant dense<0.000000e+00> : vector<8xf32>
      %58 = vector.multi_reduction <add>, %57, %cst_34 [1] : vector<8x256xf32> to vector<8xf32>
      %59 = vector.shape_cast %58 : vector<8xf32> to vector<8x1xf32>
      %cst_35 = arith.constant 0.001953125 : f32
      %60 = vector.broadcast %cst_35 : f32 to vector<8x1xf32>
      %61 = arith.mulf %59, %60 : vector<8x1xf32>
      %c0_36 = arith.constant 0 : index
      %c0_37 = arith.constant 0 : index
      %62 = vector.load %arg6[%c0_36, %c0_37] : memref<8x1xf32, #tpu.memory_space<vmem>>, vector<8x1xf32>
      tpu.vector_store %arg6[%c0_36, %c0_37], %61 {strides = array<i32>} : memref<8x1xf32, #tpu.memory_space<vmem>>, vector<8x1xf32>,
      %cst_38 = arith.constant 0.000000e+00 : f32
      %63 = vector.broadcast %cst_38 : f32 to vector<8x1xf32>
      %c0_39 = arith.constant 0 : index
      %c0_40 = arith.constant 0 : index
      %64 = vector.load %arg7[%c0_39, %c0_40] : memref<8x1xf32, #tpu.memory_space<vmem>>, vector<8x1xf32>
      tpu.vector_store %arg7[%c0_39, %c0_40], %63 {strides = array<i32>} : memref<8x1xf32, #tpu.memory_space<vmem>>, vector<8x1xf32>,
      %cst_41 = arith.constant 0.000000e+00 : f32
      %65 = vector.broadcast %cst_41 : f32 to vector<8x1xf32>
      %c0_42 = arith.constant 0 : index
      %c0_43 = arith.constant 0 : index
      %66 = vector.load %arg8[%c0_42, %c0_43] : memref<8x1xf32, #tpu.memory_space<vmem>>, vector<8x1xf32>
      tpu.vector_store %arg8[%c0_42, %c0_43], %65 {strides = array<i32>} : memref<8x1xf32, #tpu.memory_space<vmem>>, vector<8x1xf32>,
    } else {
    }
    %c0_4 = arith.constant 0 : index
    %c0_5 = arith.constant 0 : index
    %5 = vector.load %arg6[%c0_4, %c0_5] : memref<8x1xf32, #tpu.memory_space<vmem>>, vector<8x1xf32>
    %6 = vector.shape_cast %5 : vector<8x1xf32> to vector<1x8x1xf32>
    %7 = vector.broadcast %6 : vector<1x8x1xf32> to vector<2x8x256xf32>
    %8 = arith.subf %1, %7 : vector<2x8x256xf32>
    %c0_6 = arith.constant 0 : index
    %c0_7 = arith.constant 0 : index
    %9 = vector.load %arg7[%c0_6, %c0_7] : memref<8x1xf32, #tpu.memory_space<vmem>>, vector<8x1xf32>
    %cst = arith.constant dense<0.000000e+00> : vector<8x256xf32>
    %10 = vector.multi_reduction <add>, %8, %cst [0] : vector<2x8x256xf32> to vector<8x256xf32>
    %cst_8 = arith.constant dense<0.000000e+00> : vector<8xf32>
    %11 = vector.multi_reduction <add>, %10, %cst_8 [1] : vector<8x256xf32> to vector<8xf32>
    %12 = vector.shape_cast %11 : vector<8xf32> to vector<8x1xf32>
    %13 = arith.addf %9, %12 : vector<8x1xf32>
    %c0_9 = arith.constant 0 : index
    %c0_10 = arith.constant 0 : index
    %14 = vector.load %arg7[%c0_9, %c0_10] : memref<8x1xf32, #tpu.memory_space<vmem>>, vector<8x1xf32>
    tpu.vector_store %arg7[%c0_9, %c0_10], %13 {strides = array<i32>} : memref<8x1xf32, #tpu.memory_space<vmem>>, vector<8x1xf32>,
    %c0_11 = arith.constant 0 : index
    %c0_12 = arith.constant 0 : index
    %15 = vector.load %arg8[%c0_11, %c0_12] : memref<8x1xf32, #tpu.memory_space<vmem>>, vector<8x1xf32>
    %16 = arith.mulf %8, %8 : vector<2x8x256xf32>
    %cst_13 = arith.constant dense<0.000000e+00> : vector<8x256xf32>
    %17 = vector.multi_reduction <add>, %16, %cst_13 [0] : vector<2x8x256xf32> to vector<8x256xf32>
    %cst_14 = arith.constant dense<0.000000e+00> : vector<8xf32>
    %18 = vector.multi_reduction <add>, %17, %cst_14 [1] : vector<8x256xf32> to vector<8xf32>
    %19 = vector.shape_cast %18 : vector<8xf32> to vector<8x1xf32>
    %20 = arith.addf %15, %19 : vector<8x1xf32>
    %c0_15 = arith.constant 0 : index
    %c0_16 = arith.constant 0 : index
    %21 = vector.load %arg8[%c0_15, %c0_16] : memref<8x1xf32, #tpu.memory_space<vmem>>, vector<8x1xf32>
    tpu.vector_store %arg8[%c0_15, %c0_16], %20 {strides = array<i32>} : memref<8x1xf32, #tpu.memory_space<vmem>>, vector<8x1xf32>,
    %c1_i32 = arith.constant 1 : i32
    %22 = arith.addi %arg1, %c1_i32 : i32
    %23 = arith.sitofp %22 : i32 to f32
    %cst_17 = arith.constant 5.120000e+02 : f32
    %24 = arith.mulf %23, %cst_17 : f32
    %cst_18 = arith.constant 1.000000e+00 : f32
    %25 = arith.divf %cst_18, %24 : f32
    %c0_19 = arith.constant 0 : index
    %c0_20 = arith.constant 0 : index
    %26 = vector.load %arg7[%c0_19, %c0_20] : memref<8x1xf32, #tpu.memory_space<vmem>>, vector<8x1xf32>
    %27 = vector.broadcast %25 : f32 to vector<8x1xf32>
    %28 = arith.mulf %26, %27 : vector<8x1xf32>
    %c0_21 = arith.constant 0 : index
    %c0_22 = arith.constant 0 : index
    %29 = vector.load %arg8[%c0_21, %c0_22] : memref<8x1xf32, #tpu.memory_space<vmem>>, vector<8x1xf32>
    %30 = vector.broadcast %25 : f32 to vector<8x1xf32>
    %31 = arith.mulf %29, %30 : vector<8x1xf32>
    %32 = arith.mulf %28, %28 : vector<8x1xf32>
    %33 = arith.subf %31, %32 : vector<8x1xf32>
    %cst_23 = arith.constant 0.000000e+00 : f32
    %34 = vector.broadcast %cst_23 : f32 to vector<8x1xf32>
    %35 = arith.maximumf %33, %34 : vector<8x1xf32>
    %cst_24 = arith.constant 9.99999974E-6 : f32
    %36 = vector.broadcast %cst_24 : f32 to vector<8x1xf32>
    %37 = arith.addf %35, %36 : vector<8x1xf32>
    %38 = math.rsqrt %37 : vector<8x1xf32>
    %39 = arith.index_cast %arg1 : i32 to index
    %c0_25 = arith.constant 0 : index
    %c0_26 = arith.constant 0 : index
    %40 = vector.load %arg3[%39, %c0_25, %c0_26] : memref<4x8x1xf32, #tpu.memory_space<vmem>>, vector<1x8x1xf32>
    %41 = vector.shape_cast %40 : vector<1x8x1xf32> to vector<8x1xf32>
    %42 = arith.mulf %41, %38 : vector<8x1xf32>
    %43 = arith.index_cast %arg1 : i32 to index
    %c0_27 = arith.constant 0 : index
    %c0_28 = arith.constant 0 : index
    %44 = vector.load %arg4[%43, %c0_27, %c0_28] : memref<4x8x1xf32, #tpu.memory_space<vmem>>, vector<1x8x1xf32>
    %45 = vector.shape_cast %44 : vector<1x8x1xf32> to vector<8x1xf32>
    %46 = arith.mulf %28, %42 : vector<8x1xf32>
    %47 = arith.subf %45, %46 : vector<8x1xf32>
    %48 = vector.shape_cast %42 : vector<8x1xf32> to vector<1x8x1xf32>
    %49 = vector.broadcast %48 : vector<1x8x1xf32> to vector<2x8x256xf32>
    %50 = arith.mulf %8, %49 : vector<2x8x256xf32>
    %51 = vector.shape_cast %47 : vector<8x1xf32> to vector<1x8x1xf32>
    %52 = vector.broadcast %51 : vector<1x8x1xf32> to vector<2x8x256xf32>
    %53 = arith.addf %50, %52 : vector<2x8x256xf32>
    %c0_29 = arith.constant 0 : index
    %c0_30 = arith.constant 0 : index
    %c0_31 = arith.constant 0 : index
    %c0_32 = arith.constant 0 : index
    %54 = vector.load %arg5[%c0_29, %c0_30, %c0_31, %c0_32] : memref<2x1x8x256xf32, #tpu.memory_space<vmem>>, vector<2x1x8x256xf32>
    %55 = vector.shape_cast %54 : vector<2x1x8x256xf32> to vector<2x8x256xf32>
    %56 = vector.shape_cast %53 : vector<2x8x256xf32> to vector<2x1x8x256xf32>
    tpu.vector_store %arg5[%c0_29, %c0_30, %c0_31, %c0_32], %56 {strides = array<i32>} : memref<2x1x8x256xf32, #tpu.memory_space<vmem>>, vector<2x1x8x256xf32>,
    return
  }
  func.func @transform_0(%arg0: i32, %arg1: i32) -> (i32, i32, i32, i32) {
    %c0_i32 = arith.constant 0 : i32
    %c0_i32_0 = arith.constant 0 : i32
    %c0_i32_1 = arith.constant 0 : i32
    return %c0_i32, %arg1, %arg0, %c0_i32_0 : i32, i32, i32, i32
  }
  func.func @transform_1(%arg0: i32, %arg1: i32) -> (i32, i32, i32) {
    %c0_i32 = arith.constant 0 : i32
    %c0_i32_0 = arith.constant 0 : i32
    %c0_i32_1 = arith.constant 0 : i32
    return %c0_i32, %arg0, %c0_i32_0 : i32, i32, i32
  }
  func.func @transform_2(%arg0: i32, %arg1: i32) -> (i32, i32, i32) {
    %c0_i32 = arith.constant 0 : i32
    %c0_i32_0 = arith.constant 0 : i32
    %c0_i32_1 = arith.constant 0 : i32
    return %c0_i32, %arg0, %c0_i32_0 : i32, i32, i32
  }
  func.func @transform_3(%arg0: i32, %arg1: i32) -> (i32, i32, i32, i32) {
    %c0_i32 = arith.constant 0 : i32
    %c0_i32_0 = arith.constant 0 : i32
    %c0_i32_1 = arith.constant 0 : i32
    return %c0_i32, %arg1, %arg0, %c0_i32_0 : i32, i32, i32, i32
  }
}

</mosaic_0001>

<llo_original>
// kernel: tpu_custom_call.1
$region0: #{tpu_custom_call.1}
  #allocation0 [shape = 'u32[]', space=smem, size = 0x4, offset = 0x4, fixed_abs, tag = 'smem constant byte address 0x4 - core index']
  #allocation1 [shape = 'u32[144,128]{1,0:T(1,128)}', space=vmem, size = 0x12000, scoped, tag = 'internal scratch']
  #allocation2 [shape = 'f32[8,1]{1,0:T(8,128)}', space=vmem, size = 0x1000, scoped, tag = 'scratch operand']
  #allocation3 [shape = 'f32[8,1]{1,0:T(8,128)}', space=vmem, size = 0x1000, scoped, tag = 'scratch operand']
  #allocation4 [shape = 'f32[8,1]{1,0:T(8,128)}', space=vmem, size = 0x1000, scoped, tag = 'scratch operand']
  %s0 = inlined_call_operand.hbm [shape: f32[2,4,8,256], index: 0, kind: input, shape index: {}]
  %s1 = inlined_call_operand.vmem [shape: f32[4,8,1], index: 1, kind: input, shape index: {}]
  %s2 = inlined_call_operand.vmem [shape: f32[4,8,1], index: 2, kind: input, shape index: {}]
  %s3 = inlined_call_operand.hbm [shape: f32[2,4,8,256], index: 3, kind: output, shape index: {}]
  %s4 = sld [smem:[#allocation0]]
  $region53: #{tpu_custom_call.1} parent=0
    _
  %s6 = ssub.s32 1, %s4
  %s7 = scalar_select 0, %s6, %s4
  $region1: #{tpu_custom_call.1} parent=0
    #allocation5 [shape = 'u8[32768]{0}', space=vmem, size = 0x8000, scoped, tag = 'input window, operand 0']
    #allocation6 [shape = 's32[2]{0}', space=sflag, size = 0x8, scoped, tag = 'scoped memory for tpu_custom_call.1']
    #allocation7 [shape = 's32[2]{0}', space=sflag, size = 0x8, scoped, tag = 'scoped memory for tpu_custom_call.1']
    #allocation8 [shape = 'u8[32768]{0}', space=vmem, size = 0x8000, scoped, tag = 'output window, operand 0']
    %8 = vsyncpa [#allocation6], 0
    %s9 = scalar_lea.sflag [#allocation6], 1
    %10 = vsyncpa %s9, 0
    %11 = vsyncpa [#allocation7], 0
    %s12 = scalar_lea.sflag [#allocation7], 1
    %13 = vsyncpa %s12, 0
    loop: start=0, step=1, limit=6
    $region2: #{tpu_custom_call.1} parent=1 // loop_pre_header
      _
    $region3: #{tpu_custom_call.1} parent=1 // loop_header
      %s15 = sphi 0, %s19
      %p16 = scmp.ge.s32.totalorder %s15, 6
      %s22 = sphi 0, %s34
      %s23 = sphi 0, %s30
      %s24 = sphi 0, %s22
      %s25 = sphi 0, %s23
      %s26 = sphi 0, %s24
      %s27 = sphi 0, %s25
      %s39 = sphi 0, %s41
      %s42 = sphi 0, %s39
      %s43 = sphi 0, %s42
      %s59 = sphi 0, %s43
      %s65 = sphi 0, %s67
      %s68 = sphi 0, %s65
      %s69 = sphi 0, %s68
      %s85 = sphi 0, %s69
      %s91 = sphi 0, %s93
      %s94 = sphi 0, %s91
      %s95 = sphi 0, %s94
      %s111 = sphi 0, %s95
      %s119 = sphi 0, %s121
      %s122 = sphi 0, %s119
      %s123 = sphi 0, %s122
      %s139 = sphi 0, %s123
    $region4: #{tpu_custom_call.1} parent=1 // loop_header_branch
      %18 = sbr.rel (%p16) target = $region8
    $region5: #{tpu_custom_call.1} parent=1 // loop_body
      %s20 = ssub.s32 %s15, 1
      %s21 = ssub.s32 %s15, 2
      %s28 = sadd.s32 1, %s23
      %p29 = scmp.ge.s32.totalorder %s28, 4
      %s30 = scalar_select %p29, 0, %s28
      %s31 = sadd.s32 1, %s22
      %s32 = scalar_select %p29, %s31, %s22
      %p33 = scmp.ge.s32.totalorder %s32, 1
      %s34 = scalar_select %p33, 0, %s32
      %s35 = ssub.s32 %s23, %s30
      %s36 = ssub.s32 %s22, %s34
      %s37 = sor.u32 %s35, %s36
      %p38 = scmp.eq.s32.totalorder %s37, 0
      %s40 = sadd.s32 %s39, 1
      %s41 = scalar_select %p38, %s39, %s40
      %p44 = pneg %p38
      %p45 = scmp.eq.s32.totalorder %s15, 3
      %p46 = por %p44, %p45
      %p47 = scmp.ne.s32.totalorder %s39, %s42
      %p48 = scmp.eq.s32.totalorder %s15, 0
      %p49 = por %p47, %p48
      %p50 = scmp.ne.s32.totalorder %s39, %s42
      %p51 = scmp.eq.s32.totalorder %s20, 3
      %p52 = por %p50, %p51
      %p53 = scmp.ne.s32.totalorder %s42, %s43
      %p54 = scmp.eq.s32.totalorder %s20, 0
      %p55 = por %p53, %p54
      %p56 = scmp.ne.s32.totalorder %s42, %s43
      %p57 = scmp.eq.s32.totalorder %s21, 3
      %p58 = por %p56, %p57
      %p60 = scmp.ne.s32.totalorder %s43, %s59
      %p61 = scmp.eq.s32.totalorder %s21, 0
      %p62 = por %p60, %p61
      %s63 = ssub.s32 %s22, %s34
      %p64 = scmp.eq.s32.totalorder %s63, 0
      %s66 = sadd.s32 %s65, 1
      %s67 = scalar_select %p64, %s65, %s66
      %p70 = pneg %p64
      %p71 = scmp.eq.s32.totalorder %s15, 3
      %p72 = por %p70, %p71
      %p73 = scmp.ne.s32.totalorder %s65, %s68
      %p74 = scmp.eq.s32.totalorder %s15, 0
      %p75 = por %p73, %p74
      %p76 = scmp.ne.s32.totalorder %s65, %s68
      %p77 = scmp.eq.s32.totalorder %s20, 3
      %p78 = por %p76, %p77
      %p79 = scmp.ne.s32.totalorder %s68, %s69
      %p80 = scmp.eq.s32.totalorder %s20, 0
      %p81 = por %p79, %p80
      %p82 = scmp.ne.s32.totalorder %s68, %s69
      %p83 = scmp.eq.s32.totalorder %s21, 3
      %p84 = por %p82, %p83
      %p86 = scmp.ne.s32.totalorder %s69, %s85
      %p87 = scmp.eq.s32.totalorder %s21, 0
      %p88 = por %p86, %p87
      %s89 = ssub.s32 %s22, %s34
      %p90 = scmp.eq.s32.totalorder %s89, 0
      %s92 = sadd.s32 %s91, 1
      %s93 = scalar_select %p90, %s91, %s92
      %p96 = pneg %p90
      %p97 = scmp.eq.s32.totalorder %s15, 3
      %p98 = por %p96, %p97
      %p99 = scmp.ne.s32.totalorder %s91, %s94
      %p100 = scmp.eq.s32.totalorder %s15, 0
      %p101 = por %p99, %p100
      %p102 = scmp.ne.s32.totalorder %s91, %s94
      %p103 = scmp.eq.s32.totalorder %s20, 3
      %p104 = por %p102, %p103
      %p105 = scmp.ne.s32.totalorder %s94, %s95
      %p106 = scmp.eq.s32.totalorder %s20, 0
      %p107 = por %p105, %p106
      %p108 = scmp.ne.s32.totalorder %s94, %s95
      %p109 = scmp.eq.s32.totalorder %s21, 3
      %p110 = por %p108, %p109
      %p112 = scmp.ne.s32.totalorder %s95, %s111
      %p113 = scmp.eq.s32.totalorder %s21, 0
      %p114 = por %p112, %p113
      %s115 = ssub.s32 %s23, %s30
      %s116 = ssub.s32 %s22, %s34
      %s117 = sor.u32 %s115, %s116
      %p118 = scmp.eq.s32.totalorder %s117, 0
      %s120 = sadd.s32 %s119, 1
      %s121 = scalar_select %p118, %s119, %s120
      %p124 = pneg %p118
      %p125 = scmp.eq.s32.totalorder %s15, 3
      %p126 = por %p124, %p125
      %p127 = scmp.ne.s32.totalorder %s119, %s122
      %p128 = scmp.eq.s32.totalorder %s15, 0
      %p129 = por %p127, %p128
      %p130 = scmp.ne.s32.totalorder %s119, %s122
      %p131 = scmp.eq.s32.totalorder %s20, 3
      %p132 = por %p130, %p131
      %p133 = scmp.ne.s32.totalorder %s122, %s123
      %p134 = scmp.eq.s32.totalorder %s20, 0
      %p135 = por %p133, %p134
      %p136 = scmp.ne.s32.totalorder %s122, %s123
      %p137 = scmp.eq.s32.totalorder %s21, 3
      %p138 = por %p136, %p137
      %p140 = scmp.ne.s32.totalorder %s123, %s139
      %p141 = scmp.eq.s32.totalorder %s21, 0
      %p142 = por %p140, %p141
      %p143 = scmp.le.s32.totalorder 1, %s15
      %p144 = scmp.lt.s32.totalorder %s15, 5
      %p145 = pnand %p143, %p144
      %p146 = pneg %p145
      // Predicated region
      $region9: #{tpu_custom_call.1} parent=5 // pred_check
        _
      $region10: #{tpu_custom_call.1} parent=5 // pred_check_branch
        %148 = sbr.rel (%p145) target = $region12
      $region11: #{tpu_custom_call.1} parent=5 // pred_region
        %s149 = ssub.s32 %s15, 1
        // Predicated region
        $region13: #{tpu_custom_call.1} parent=11 // pred_check
          %p150 = pneg %p81
        $region14: #{tpu_custom_call.1} parent=11 // pred_check_branch
          %152 = sbr.rel (%p150) target = $region16
        $region15: #{tpu_custom_call.1} parent=11 // pred_region
          %p153 = scmp.lt.s32.totalorder %s24, 0
          %s154 = scalar_select %p153, %s24, 0
          %s155 = smul.addr %s154, 8
          %s156 = scalar_lea.vmem %s1, %s155
        $region16: #{tpu_custom_call.1} parent=11 // pred_fallthru
          _
        // Predicated region
        $region17: #{tpu_custom_call.1} parent=11 // pred_check
          %p157 = pneg %p107
        $region18: #{tpu_custom_call.1} parent=11 // pred_check_branch
          %159 = sbr.rel (%p157) target = $region20
        $region19: #{tpu_custom_call.1} parent=11 // pred_region
          %p160 = scmp.lt.s32.totalorder %s24, 0
          %s161 = scalar_select %p160, %s24, 0
          %s162 = smul.addr %s161, 8
          %s163 = scalar_lea.vmem %s2, %s162
        $region20: #{tpu_custom_call.1} parent=11 // pred_fallthru
          _
      $region12: #{tpu_custom_call.1} parent=5 // pred_fallthru
        _
      %p164 = scmp.lt.s32.totalorder %s15, 4
      // Predicated region
      $region21: #{tpu_custom_call.1} parent=5 // pred_check
        %p165 = pneg %p164
      $region22: #{tpu_custom_call.1} parent=5 // pred_check_branch
        %167 = sbr.rel (%p165) target = $region24
      $region23: #{tpu_custom_call.1} parent=5 // pred_region
        // Predicated region
        $region25: #{tpu_custom_call.1} parent=23 // pred_check
          %p168 = pneg %p49
        $region26: #{tpu_custom_call.1} parent=23 // pred_check_branch
          %170 = sbr.rel (%p168) target = $region28
        $region27: #{tpu_custom_call.1} parent=23 // pred_region
          %s171 = sand.u32 %s39, 1
          %s172 = scalar_lea.sflag [#allocation6], %s171
          %s173 = sand.u32 %s39, 1
          %s174 = smul.addr %s173, 32
          %s175 = scalar_lea.vmem [#allocation5], %s174
          %s177 = ssub.s32 512, 512
          %178 = vsyncadd %s172, %s177
          %s179 = smul.addr %s22, 2
          %s180 = smul.addr %s23, 2
          %s181 = sadd.s32 %s179, %s180
          %s182 = smul.addr %s181, 128
          %s183 = scalar_lea.hbm %s0, %s182
          %s184 = sshll.u32 %s175, 4
          %s185 = int_to_ptr.vmem [resolvable:$true] %s184
          %190 = dma.hbm_to_vmem [thread:$0]  %s183, 512, %s185, %s172, 1024, 256, 16
        $region28: #{tpu_custom_call.1} parent=23 // pred_fallthru
          _
      $region24: #{tpu_custom_call.1} parent=5 // pred_fallthru
        _
      %p191 = scmp.le.s32.totalorder 1, %s15
      %p192 = scmp.lt.s32.totalorder %s15, 5
      %p193 = pnand %p191, %p192
      %p194 = pneg %p193
      // Predicated region
      $region29: #{tpu_custom_call.1} parent=5 // pred_check
        _
      $region30: #{tpu_custom_call.1} parent=5 // pred_check_branch
        %196 = sbr.rel (%p193) target = $region32
      $region31: #{tpu_custom_call.1} parent=5 // pred_region
        %s197 = ssub.s32 %s15, 1
        %s198 = sand.u32 %s42, 1
        %s199 = scalar_lea.sflag [#allocation6], %s198
        %s200 = sand.u32 %s42, 1
        %s201 = smul.addr %s200, 32
        %s202 = scalar_lea.vmem [#allocation5], %s201
        // Predicated region
        $region33: #{tpu_custom_call.1} parent=31 // pred_check
          %p203 = pneg %p55
        $region34: #{tpu_custom_call.1} parent=31 // pred_check_branch
          %205 = sbr.rel (%p203) target = $region36
        $region35: #{tpu_custom_call.1} parent=31 // pred_region
          %206 = dma.done %s199, 512
        $region36: #{tpu_custom_call.1} parent=31 // pred_fallthru
          _
        %s207 = sand.u32 %s42, 1
        %s208 = scalar_lea.sflag [#allocation6], %s207
        %s209 = sand.u32 %s42, 1
        %s210 = smul.addr %s209, 32
        %s211 = scalar_lea.vmem [#allocation5], %s210
        %p212 = pneg %p55
        %p213 = pneg %p52
        %p214 = scmp.lt.s32.totalorder %s24, 0
        %s215 = scalar_select %p214, %s24, 0
        %s216 = smul.addr %s215, 8
        %s217 = scalar_lea.vmem %s1, %s216
        %p218 = pneg %p81
        %p219 = pneg %p78
        %p220 = scmp.lt.s32.totalorder %s24, 0
        %s221 = scalar_select %p220, %s24, 0
        %s222 = smul.addr %s221, 8
        %s223 = scalar_lea.vmem %s2, %s222
        %p224 = pneg %p107
        %p225 = pneg %p104
        %p226 = pneg %p135
        %p227 = pneg %p132
        %s228 = sand.u32 %s122, 1
        %s229 = scalar_lea.sflag [#allocation7], %s228
        %s230 = sand.u32 %s122, 1
        %s231 = smul.addr %s230, 32
        %s232 = scalar_lea.vmem [#allocation8], %s231
        %p233 = scmp.lt.s32.totalorder %s24, 0
        %s234 = scalar_select %p233, %s24, 0
        %s235 = smul.addr %s234, 8
        %s236 = scalar_lea.vmem %s1, %s235
        %p237 = scmp.lt.s32.totalorder %s24, 0
        %s238 = scalar_select %p237, %s24, 0
        %s239 = smul.addr %s238, 8
        %s240 = scalar_lea.vmem %s2, %s239
        %v241 = vld [vmem:[%s202] sm:$0xff]
        %v242 = vld [vmem:[%s202 + $0x8] sm:$0xff]
        %v243 = vld [vmem:[%s202 + $0x10] sm:$0xff]
        %v244 = vld [vmem:[%s202 + $0x18] sm:$0xff]
        %p245 = scmp.eq.s32.totalorder %s25, 0
        // Predicated region
        $region37: #{tpu_custom_call.1} parent=31 // pred_check
          %p246 = pneg %p245
        $region38: #{tpu_custom_call.1} parent=31 // pred_check_branch
          %248 = sbr.rel (%p246) target = $region40
        $region39: #{tpu_custom_call.1} parent=31 // pred_region
          %v249 = vadd.f32 %v241, %v243
          %v250 = vadd.f32 %v242, %v244
          %v251 = vadd.f32 %v249, %v250
          %252 = vadd.xlane.f32.xlu0 %v251
          %v253 = vpop.xlane.xlu0 %252
          %v254 = vmul.f32 %v253, 0.001953125
          %vm255 = vcmask 7168
          %256 = vst.msk [vmem:[#allocation2] sm:$0xff] %vm255, %v254
          %257 = vst.msk [vmem:[#allocation3] sm:$0xff] %vm255, 0.0
          %258 = vst.msk [vmem:[#allocation4] sm:$0xff] %vm255, 0.0
        $region40: #{tpu_custom_call.1} parent=31 // pred_fallthru
          _
        %v259 = vld [vmem:[#allocation2] sm:$0xff]
        %261 = vset.pattern.permute.xlu0 0
        %262 = vperm.xlu0 %261, %v259
        %v263 = vpop.permute.xlu0 %262
        %v265 = vsub.f32 %v241, %v263
        %v266 = vsub.f32 %v242, %v263
        %v267 = vsub.f32 %v243, %v263
        %v268 = vsub.f32 %v244, %v263
        %v269 = vld [vmem:[#allocation3] sm:$0xff]
        %v270 = vadd.f32 %v265, %v267
        %v271 = vadd.f32 %v266, %v268
        %v272 = vadd.f32 %v270, %v271
        %273 = vadd.xlane.f32.xlu0 %v272
        %v274 = vpop.xlane.xlu0 %273
        %v275 = vadd.f32 %v269, %v274
        %vm276 = vcmask 7168
        %277 = vst.msk [vmem:[#allocation3] sm:$0xff] %vm276, %v275
        %v278 = vld [vmem:[#allocation4] sm:$0xff]
        %v279 = vmul.f32 %v265, %v265
        %v280 = vmul.f32 %v266, %v266
        %v281 = vmul.f32 %v267, %v267
        %v282 = vmul.f32 %v268, %v268
        %v283 = vadd.f32 %v279, %v281
        %v284 = vadd.f32 %v280, %v282
        %v285 = vadd.f32 %v283, %v284
        %286 = vadd.xlane.f32.xlu0 %v285
        %v287 = vpop.xlane.xlu0 %286
        %v288 = vadd.f32 %v278, %v287
        %289 = vst.msk [vmem:[#allocation4] sm:$0xff] %vm276, %v288
        %s290 = sadd.s32 %s25, 1
        %s291 = scvt.s32.f32 %s290
        %s292 = smul.f32 %s291, 512.0
        %v293 = vstv %s292
        %v294 = vrcp.pop %v293
        %s295 = vtos %v294
        %v296 = vld [vmem:[#allocation3] sm:$0xff]
        %v297 = vstv %s295
        %v298 = vmul.f32 %v296, %v297
        %v299 = vld [vmem:[#allocation4] sm:$0xff]
        %v300 = vmul.f32 %v299, %v297
        %v301 = vmul.f32 %v298, %v298
        %v302 = vsub.f32 %v300, %v301
        %v303 = vmax.f32 %v302, 0.0
        %v304 = vadd.f32 %v303, 1e-05
        %v305 = vrsqrt.pop %v304
        %s306 = smul.u32 %s25, 8
        %s307 = scalar_lea.vmem %s236, %s306
        %v308 = vld [vmem:[%s307] sm:$0xff]
        %v309 = vmul.f32 %v308, %v305
        %s310 = scalar_lea.vmem %s240, %s306
        %v311 = vld [vmem:[%s310] sm:$0xff]
        %v312 = vmul.f32 %v298, %v309
        %v313 = vsub.f32 %v311, %v312
        %315 = vset.pattern.permute.xlu0 0
        %316 = vperm.xlu0 %315, %v309
        %v317 = vpop.permute.xlu0 %316
        %v319 = vmul.f32 %v265, %v317
        %v320 = vmul.f32 %v266, %v317
        %v321 = vmul.f32 %v267, %v317
        %v322 = vmul.f32 %v268, %v317
        %324 = vset.pattern.permute.xlu0 0
        %325 = vperm.xlu0 %324, %v313
        %v326 = vpop.permute.xlu0 %325
        %v328 = vadd.f32 %v319, %v326
        %v329 = vadd.f32 %v320, %v326
        %v330 = vadd.f32 %v321, %v326
        %v331 = vadd.f32 %v322, %v326
        %332 = vst [vmem:[%s232] sm:$0xff] %v328
        %333 = vst [vmem:[%s232 + $0x8] sm:$0xff] %v329
        %334 = vst [vmem:[%s232 + $0x10] sm:$0xff] %v330
        %335 = vst [vmem:[%s232 + $0x18] sm:$0xff] %v331
        %s336 = sand.u32 %s122, 1
        %s337 = scalar_lea.sflag [#allocation7], %s336
        %s338 = sand.u32 %s122, 1
        %s339 = smul.addr %s338, 32
        %s340 = scalar_lea.vmem [#allocation8], %s339
        // Predicated region
        $region41: #{tpu_custom_call.1} parent=31 // pred_check
          %p341 = pneg %p132
        $region42: #{tpu_custom_call.1} parent=31 // pred_check_branch
          %343 = sbr.rel (%p341) target = $region44
        $region43: #{tpu_custom_call.1} parent=31 // pred_region
          %s345 = ssub.s32 512, 512
          %346 = vsyncadd %s337, %s345
          %s347 = smul.addr %s24, 2
          %s348 = smul.addr %s25, 2
          %s349 = sadd.s32 %s347, %s348
          %s350 = smul.addr %s349, 128
          %s351 = scalar_lea.hbm %s3, %s350
          %s352 = sshll.u32 %s340, 4
          %s353 = int_to_ptr.vmem [resolvable:$true] %s352
          %358 = dma.vmem_to_hbm [thread:$0]  %s353, 512, %s351, %s337, 256, 1024, 16
        $region44: #{tpu_custom_call.1} parent=31 // pred_fallthru
          _
      $region32: #{tpu_custom_call.1} parent=5 // pred_fallthru
        _
      %p359 = scmp.le.s32.totalorder 2, %s15
      // Predicated region
      $region45: #{tpu_custom_call.1} parent=5 // pred_check
        %p360 = pneg %p359
      $region46: #{tpu_custom_call.1} parent=5 // pred_check_branch
        %362 = sbr.rel (%p360) target = $region48
      $region47: #{tpu_custom_call.1} parent=5 // pred_region
        %s363 = ssub.s32 %s15, 2
        // Predicated region
        $region49: #{tpu_custom_call.1} parent=47 // pred_check
          %p364 = pneg %p138
        $region50: #{tpu_custom_call.1} parent=47 // pred_check_branch
          %366 = sbr.rel (%p364) target = $region52
        $region51: #{tpu_custom_call.1} parent=47 // pred_region
          %s367 = sand.u32 %s123, 1
          %s368 = scalar_lea.sflag [#allocation7], %s367
          %s369 = sand.u32 %s123, 1
          %s370 = smul.addr %s369, 32
          %s371 = scalar_lea.vmem [#allocation8], %s370
          %372 = dma.done %s368, 512
        $region52: #{tpu_custom_call.1} parent=47 // pred_fallthru
          _
      $region48: #{tpu_custom_call.1} parent=5 // pred_fallthru
        _
    $region6: #{tpu_custom_call.1} parent=1 // loop_footer
      %s19 = sadd.s32 1, %s15
    $region7: #{tpu_custom_call.1} parent=1 // loop_footer_branch
      %14 = sbr.rel target = $region3
    $region8: #{tpu_custom_call.1} parent=1 // loop_exit
      _
    %373 = vsyncpa [#allocation6], 1
    %s374 = scalar_lea.sflag [#allocation6], 1
    %375 = vsyncpa %s374, 1
    %376 = vsyncpa [#allocation7], 1
    %s377 = scalar_lea.sflag [#allocation7], 1
    %378 = vsyncpa %s377, 1

</llo_original>
